<compile_context>
chip_gen: v6e
topology: v6e:2x2x1
jax: 0.10.0
libtpu: 0.0.40
codegen_flags: <defaults>
</compile_context>

<pallas_src>
import functools

import jax
import jax.numpy as jnp
import numpy as np
from jax import lax
from jax.experimental import pallas as pl
from jax.experimental.pallas import tpu as pltpu

EPS = 1e-6


def _round_up(x, m):
    return ((x + m - 1) // m) * m


def _word_embedding_kernel(emb_size, token_block):
    E = emb_size
    TB = token_block

    def kernel(ids_ref, emb_hbm, gamma_ref, beta_ref, out_ref, gather_buf, sem):
        i = pl.program_id(0)
        base = pl.multiple_of(i * TB, TB)

        # Issue all TB row-gather DMAs (HBM -> VMEM scratch) before waiting so
        # many small row copies are in flight simultaneously.
        def issue(t, carry):
            row = ids_ref[base + t]
            pltpu.make_async_copy(emb_hbm.at[row], gather_buf.at[t], sem).start()
            return carry

        lax.fori_loop(0, TB, issue, 0)

        # Wait for all TB completions (all copies are the same size, so a
        # one-row descriptor per wait decrements the semaphore correctly).
        def wait(t, carry):
            pltpu.make_async_copy(emb_hbm.at[0], gather_buf.at[0], sem).wait()
            return carry

        lax.fori_loop(0, TB, wait, 0)

        # LayerNorm over the whole (TB, E) tile in f32.
        x = gather_buf[...].astype(jnp.float32)                  # (TB, E)
        mean = jnp.mean(x, axis=-1, keepdims=True)                # (TB, 1)
        xc = x - mean
        # torch.std default is the unbiased estimator (divide by N-1),
        # and UER adds eps to std (not var). Do not "fix" these.
        var = jnp.sum(xc * xc, axis=-1, keepdims=True) / (E - 1)
        std = jnp.sqrt(var)
        inv = pl.reciprocal(std + EPS, approx=False)              # (TB, 1)
        y = (gamma_ref[...] * inv) * xc + beta_ref[...]           # (TB, E)
        out_ref[...] = y.astype(out_ref.dtype)

    return kernel


@functools.partial(jax.jit, static_argnames=("token_block",))
def word_embedding_forward(src, emb_table, gamma, beta, *, token_block=256):
    """src: [B, S] int token ids; emb_table: [V, E] (native dtype, e.g. bf16);
    gamma/beta: [E] -> out [B, S, E] float32."""
    B, S = src.shape
    V, E = emb_table.shape
    T = B * S

    # Pick a token block: multiple of 8, at most the (padded) token count.
    TB = min(_round_up(token_block, 8), _round_up(T, 8))
    T_pad = _round_up(T, TB)
    num_blocks = T_pad // TB

    ids_flat = src.reshape(T).astype(jnp.int32)
    if T_pad != T:
        # Pad with token 0 (a valid row); padded outputs are dropped below.
        ids_flat = jnp.concatenate(
            [ids_flat, jnp.zeros((T_pad - T,), dtype=jnp.int32)]
        )

    gamma2d = gamma.reshape(1, E).astype(jnp.float32)
    beta2d = beta.reshape(1, E).astype(jnp.float32)

    grid_spec = pltpu.PrefetchScalarGridSpec(
        num_scalar_prefetch=1,
        grid=(num_blocks,),
        in_specs=[
            # Embedding table stays in HBM; rows are gathered manually via DMA.
            pl.BlockSpec(memory_space=pl.ANY),
            # LayerNorm params: same (only) block every step.
            pl.BlockSpec((1, E), lambda i, ids: (0, 0)),
            pl.BlockSpec((1, E), lambda i, ids: (0, 0)),
        ],
        out_specs=pl.BlockSpec((TB, E), lambda i, ids: (i, 0)),
        scratch_shapes=[
            pltpu.VMEM((TB, E), emb_table.dtype),   # gathered rows
            pltpu.SemaphoreType.DMA,                # counting DMA semaphore
        ],
    )

    table_bytes_per_row = E * jnp.dtype(emb_table.dtype).itemsize
    cost = pl.CostEstimate(
        flops=int(8 * T_pad * E),
        transcendentals=int(2 * T_pad),
        bytes_accessed=int(
            T_pad * (table_bytes_per_row + 4 * E) + 4 * T_pad + 8 * E
        ),
    )

    out_flat = pl.pallas_call(
        _word_embedding_kernel(E, TB),
        out_shape=jax.ShapeDtypeStruct((T_pad, E), jnp.float32),
        grid_spec=grid_spec,
        compiler_params=pltpu.CompilerParams(
            # Each step writes a disjoint (TB, E) output block -> parallel is
            # legal; lets v7x shard blocks across its two TensorCores.
            dimension_semantics=("parallel",),
        ),
        cost_estimate=cost,
    )(ids_flat, emb_table, gamma2d, beta2d)

    return out_flat[:T].reshape(B, S, E)


def word_embedding_reference(src, emb_table, gamma, beta):
    """Pure-JAX reference matching UER's WordEmbedding (eval mode)."""
    emb = jnp.take(emb_table, src, axis=0).astype(jnp.float32)   # [B, S, E]
    mean = jnp.mean(emb, axis=-1, keepdims=True)
    xc = emb - mean
    var = jnp.sum(xc * xc, axis=-1, keepdims=True) / (emb.shape[-1] - 1)
    std = jnp.sqrt(var)
    return gamma * xc / (std + EPS) + beta


if __name__ == "__main__":
    # Small, deterministic config consistent with the module's forward:
    #   src: [batch_size, seq_length] token ids
    batch_size, seq_length = 2, 8
    vocab_size, emb_size = 64, 32

    key = jax.random.PRNGKey(0)
    k_ids, k_tab = jax.random.split(key)

    src = jax.random.randint(
        k_ids, (batch_size, seq_length), minval=0, maxval=vocab_size,
        dtype=jnp.int32,
    )
    # nn.Embedding default init ~ N(0, 1); LayerNorm gamma=1, beta=0.
    # Table kept in its native dtype (f32 here; bf16 works too and halves
    # gather traffic).
    emb_table = jax.random.normal(k_tab, (vocab_size, emb_size), dtype=jnp.float32)
    gamma = jnp.ones((emb_size,), dtype=jnp.float32)
    beta = jnp.zeros((emb_size,), dtype=jnp.float32)

    out = word_embedding_forward(src, emb_table, gamma, beta)
    out = jax.block_until_ready(out)

    ref = word_embedding_reference(src, emb_table, gamma, beta)
    np.testing.assert_allclose(np.asarray(out), np.asarray(ref), atol=1e-5, rtol=1e-5)
    assert out.shape == (batch_size, seq_length, emb_size)

    print("KERNEL_OK")
</pallas_src>

<mosaic_0001>
module attributes {stable_mosaic.version = 11 : i64} {
  func.func @kernel(%arg0: i32, %arg1: memref<16xi32, #tpu.memory_space<smem>>, %arg2: memref<64x32xf32, #tpu.memory_space<any>>, %arg3: memref<1x32xf32, #tpu.memory_space<vmem>>, %arg4: memref<1x32xf32, #tpu.memory_space<vmem>>, %arg5: memref<16x32xf32, #tpu.memory_space<vmem>>, %arg6: memref<16x32xf32, #tpu.memory_space<vmem>>, %arg7: memref<!tpu.dma_semaphore, #tpu.memory_space<semaphore_mem>>) attributes {dimension_semantics = [#tpu.dimension_semantics<parallel>], iteration_bounds = array<i64: 1>, scalar_prefetch = 1 : i64, scratch_operands = 2 : i64, tpu.core_type = #tpu.core_type<tc>, window_params = [{}, {pipeline_mode = #tpu.pipeline_mode<synchronous>, transform_indices = @transform_1, window_bounds = array<i64: 1, 32>}, {pipeline_mode = #tpu.pipeline_mode<synchronous>, transform_indices = @transform_2, window_bounds = array<i64: 1, 32>}, {transform_indices = @transform_3, window_bounds = array<i64: 16, 32>}]} {
    %c16_i32 = arith.constant 16 : i32
    %0 = arith.muli %arg0, %c16_i32 : i32
    %1 = tpu.assume_multiple %0, 16 : i32
    %c0_i32 = arith.constant 0 : i32
    %c16_i32_0 = arith.constant 16 : i32
    %2 = arith.addi %c0_i32, %c16_i32_0 : i32
    %c1_i32 = arith.constant 1 : i32
    scf.for %arg8 = %c0_i32 to %2 step %c1_i32  : i32 {
      %29 = arith.addi %1, %arg8 : i32
      %30 = arith.index_cast %29 : i32 to index
      %31 = memref.load %arg1[%30] : memref<16xi32, #tpu.memory_space<smem>>
      %c0_i32_16 = arith.constant 0 : i32
      %32 = tpu.memref_slice %arg2[%31, %c0_i32_16] : memref<64x32xf32, #tpu.memory_space<any>> -> memref<1x32xf32, #tpu.memory_space<any>>
      %33 = tpu.memref_squeeze %32 : memref<1x32xf32, #tpu.memory_space<any>> -> memref<32xf32, #tpu.memory_space<any>>
      %c0_i32_17 = arith.constant 0 : i32
      %34 = tpu.memref_slice %arg6[%arg8, %c0_i32_17] : memref<16x32xf32, #tpu.memory_space<vmem>> -> memref<1x32xf32, #tpu.memory_space<vmem>>
      %35 = tpu.memref_squeeze %34 : memref<1x32xf32, #tpu.memory_space<vmem>> -> memref<32xf32, #tpu.memory_space<vmem>>
      tpu.enqueue_dma source(%33 : memref<32xf32, #tpu.memory_space<any>>) target(%35 : memref<32xf32, #tpu.memory_space<vmem>>) target_semaphore(%arg7 : memref<!tpu.dma_semaphore, #tpu.memory_space<semaphore_mem>>)
    }
    %c16_i32_1 = arith.constant 16 : i32
    %c0_i32_2 = arith.constant 0 : i32
    %c16_i32_3 = arith.constant 16 : i32
    %3 = arith.addi %c0_i32_2, %c16_i32_3 : i32
    %c1_i32_4 = arith.constant 1 : i32
    scf.for %arg8 = %c0_i32_2 to %3 step %c1_i32_4  : i32 {
      %c0_i32_16 = arith.constant 0 : i32
      %c0_i32_17 = arith.constant 0 : i32
      %c0_i32_18 = arith.constant 0 : i32
      %29 = tpu.memref_slice %arg2[%c0_i32_16, %c0_i32_18] : memref<64x32xf32, #tpu.memory_space<any>> -> memref<1x32xf32, #tpu.memory_space<any>>
      %30 = tpu.memref_squeeze %29 : memref<1x32xf32, #tpu.memory_space<any>> -> memref<32xf32, #tpu.memory_space<any>>
      %c0_i32_19 = arith.constant 0 : i32
      %31 = tpu.memref_slice %arg6[%c0_i32_17, %c0_i32_19] : memref<16x32xf32, #tpu.memory_space<vmem>> -> memref<1x32xf32, #tpu.memory_space<vmem>>
      %32 = tpu.memref_squeeze %31 : memref<1x32xf32, #tpu.memory_space<vmem>> -> memref<32xf32, #tpu.memory_space<vmem>>
      tpu.wait_dma2 semaphore(%arg7 : memref<!tpu.dma_semaphore, #tpu.memory_space<semaphore_mem>>) src(%30 : memref<32xf32, #tpu.memory_space<any>>) dst(%32 : memref<32xf32, #tpu.memory_space<vmem>>)
    }
    %c0 = arith.constant 0 : index
    %c0_5 = arith.constant 0 : index
    %4 = vector.load %arg6[%c0, %c0_5] : memref<16x32xf32, #tpu.memory_space<vmem>>, vector<16x32xf32>
    %cst = arith.constant dense<0.000000e+00> : vector<16xf32>
    %5 = vector.multi_reduction <add>, %4, %cst [1] : vector<16x32xf32> to vector<16xf32>
    %6 = vector.shape_cast %5 : vector<16xf32> to vector<16x1xf32>
    %cst_6 = arith.constant 3.200000e+01 : f32
    %7 = vector.broadcast %cst_6 : f32 to vector<16x1xf32>
    %8 = arith.divf %6, %7 : vector<16x1xf32>
    %9 = vector.broadcast %8 : vector<16x1xf32> to vector<16x32xf32>
    %10 = arith.subf %4, %9 : vector<16x32xf32>
    %11 = arith.mulf %10, %10 : vector<16x32xf32>
    %cst_7 = arith.constant dense<0.000000e+00> : vector<16xf32>
    %12 = vector.multi_reduction <add>, %11, %cst_7 [1] : vector<16x32xf32> to vector<16xf32>
    %13 = vector.shape_cast %12 : vector<16xf32> to vector<16x1xf32>
    %cst_8 = arith.constant 3.100000e+01 : f32
    %14 = vector.broadcast %cst_8 : f32 to vector<16x1xf32>
    %15 = arith.divf %13, %14 : vector<16x1xf32>
    %16 = math.sqrt %15 : vector<16x1xf32>
    %cst_9 = arith.constant 9.99999997E-7 : f32
    %17 = vector.broadcast %cst_9 : f32 to vector<16x1xf32>
    %18 = arith.addf %16, %17 : vector<16x1xf32>
    %19 = tpu.reciprocal %18 : vector<16x1xf32> -> vector<16x1xf32>
    %c0_10 = arith.constant 0 : index
    %c0_11 = arith.constant 0 : index
    %20 = vector.load %arg3[%c0_10, %c0_11] : memref<1x32xf32, #tpu.memory_space<vmem>>, vector<1x32xf32>
    %21 = vector.broadcast %20 : vector<1x32xf32> to vector<16x32xf32>
    %22 = vector.broadcast %19 : vector<16x1xf32> to vector<16x32xf32>
    %23 = arith.mulf %21, %22 : vector<16x32xf32>
    %24 = arith.mulf %23, %10 : vector<16x32xf32>
    %c0_12 = arith.constant 0 : index
    %c0_13 = arith.constant 0 : index
    %25 = vector.load %arg4[%c0_12, %c0_13] : memref<1x32xf32, #tpu.memory_space<vmem>>, vector<1x32xf32>
    %26 = vector.broadcast %25 : vector<1x32xf32> to vector<16x32xf32>
    %27 = arith.addf %24, %26 : vector<16x32xf32>
    %c0_14 = arith.constant 0 : index
    %c0_15 = arith.constant 0 : index
    %28 = vector.load %arg5[%c0_14, %c0_15] : memref<16x32xf32, #tpu.memory_space<vmem>>, vector<16x32xf32>
    tpu.vector_store %arg5[%c0_14, %c0_15], %27 {strides = array<i32>} : memref<16x32xf32, #tpu.memory_space<vmem>>, vector<16x32xf32>,
    return
  }
  func.func @transform_1(%arg0: i32, %arg1: memref<16xi32, #tpu.memory_space<smem>>) -> (i32, i32) {
    %c0_i32 = arith.constant 0 : i32
    %c0_i32_0 = arith.constant 0 : i32
    %c0_i32_1 = arith.constant 0 : i32
    return %c0_i32, %c0_i32_0 : i32, i32
  }
  func.func @transform_2(%arg0: i32, %arg1: memref<16xi32, #tpu.memory_space<smem>>) -> (i32, i32) {
    %c0_i32 = arith.constant 0 : i32
    %c0_i32_0 = arith.constant 0 : i32
    %c0_i32_1 = arith.constant 0 : i32
    return %c0_i32, %c0_i32_0 : i32, i32
  }
  func.func @transform_3(%arg0: i32, %arg1: memref<16xi32, #tpu.memory_space<smem>>) -> (i32, i32) {
    %c0_i32 = arith.constant 0 : i32
    %c0_i32_0 = arith.constant 0 : i32
    return %arg0, %c0_i32 : i32, i32
  }
}

</mosaic_0001>

<llo_original>
// kernel: word_embedding_forward.1
$region0: #{word_embedding_forward.1}
  #allocation0 [shape = 'u32[]', space=smem, size = 0x4, offset = 0x4, fixed_abs, tag = 'smem constant byte address 0x4 - core index']
  #allocation1 [shape = 'u32[144,128]{1,0:T(1,128)}', space=vmem, size = 0x12000, scoped, tag = 'internal scratch']
  #allocation2 [shape = 'f32[16,32]{1,0:T(8,128)}', space=vmem, size = 0x2000, scoped, tag = 'scratch operand']
  #allocation3 [shape = 's32[1]{0}', space=sflag, size = 0x4, scoped, tag = 'scratch operand']
  #allocation4 [shape = 's32[1]{0}', space=sflag, size = 0x4, scoped, tag = 'scoped memory for word_embedding_forward.1']
  #allocation5 [shape = 'u8[512]{0}', space=smem, size = 0x200, scoped, tag = 'prefetched SMEM operand 0']
  #allocation8 [shape = 's32[]', space=sflag, size = 0x4, offset = 0, fixed_abs, tag = 'sflag constant byte address 0x0 - dummy sync flag']
  %s0 = inlined_call_operand.vmem [shape: s32[16], index: 0, kind: input, shape index: {}]
  %s1 = inlined_call_operand.vmem [shape: f32[64,32], index: 1, kind: input, shape index: {}]
  %s2 = inlined_call_operand.vmem [shape: f32[1,32], index: 2, kind: input, shape index: {}]
  %s3 = inlined_call_operand.vmem [shape: f32[1,32], index: 3, kind: input, shape index: {}]
  %s4 = inlined_call_operand.hbm [shape: f32[16,32], index: 4, kind: output, shape index: {}]
  %s5 = sld [smem:[#allocation0]]
  $region62: #{word_embedding_forward.1} parent=0
    _
  %s7 = ssub.s32 1, %s5
  %s8 = scalar_select 0, %s7, %s5
  %s9 = sshll.u32 %s0, 4
  %s10 = int_to_ptr.vmem [resolvable:$true] %s9
  %12 = dma.vmem_to_smem %s10, 16, [#allocation5], [#allocation4]
  %13 = dma.done [#allocation4], 16
  %14 = sfence
  $region1: #{word_embedding_forward.1} parent=0
    #allocation6 [shape = 'u8[8192]{0}', space=vmem, size = 0x2000, scoped, tag = 'output window, operand 0, single buffered']
    #allocation7 [shape = 's32[1]{0}', space=sflag, size = 0x4, scoped, tag = 'scoped memory for word_embedding_forward.1']
    %15 = vsyncpa [#allocation7], 0
    // Predicated region
    $region2: #{word_embedding_forward.1} parent=1 // pred_check
      _
    $region3: #{word_embedding_forward.1} parent=1 // pred_check_branch
      %17 = sbr.rel (0) target = $region5
    $region4: #{word_embedding_forward.1} parent=1 // pred_region
      _
    $region5: #{word_embedding_forward.1} parent=1 // pred_fallthru
      _
    // Predicated region
    $region6: #{word_embedding_forward.1} parent=1 // pred_check
      _
    $region7: #{word_embedding_forward.1} parent=1 // pred_check_branch
      %19 = sbr.rel (0) target = $region9
    $region8: #{word_embedding_forward.1} parent=1 // pred_region
      _
    $region9: #{word_embedding_forward.1} parent=1 // pred_fallthru
      _
    %s20 = smul.u32 0, 16
    loop: start=0, step=1, limit=16
    $region10: #{word_embedding_forward.1} parent=1 // loop_pre_header
      _
    $region11: #{word_embedding_forward.1} parent=1 // loop_header
      %s22 = sphi 0, %s26
      %p23 = scmp.ge.s32.totalorder %s22, 16
    $region12: #{word_embedding_forward.1} parent=1 // loop_header_branch
      %25 = sbr.rel (%p23) target = $region16
    $region13: #{word_embedding_forward.1} parent=1 // loop_body
      %s27 = sadd.s32 %s20, %s22
      %s28 = sld [smem:[#allocation5 + %s27]]
      %s29 = scalar_lea.vmem %s1, %s28
      %s30 = scalar_lea.vmem [#allocation2], %s22
      %p32 = scmp.lt.u32.totalorder 1, 8
      %p33 = pneg %p32
      // Predicated region
      $region17: #{word_embedding_forward.1} parent=13 // pred_check
        _
      $region18: #{word_embedding_forward.1} parent=13 // pred_check_branch
        %35 = sbr.rel (%p32) target = $region20
      $region19: #{word_embedding_forward.1} parent=13 // pred_region
        %s51 = sand.u32 1, 7
        %p52 = scmp.eq.s32.totalorder %s51, 0
        %p53 = pneg %p52
        // Predicated region
        $region32: #{word_embedding_forward.1} parent=19 // pred_check
          _
        $region33: #{word_embedding_forward.1} parent=19 // pred_check_branch
          %55 = sbr.rel (%p52) target = $region35
        $region34: #{word_embedding_forward.1} parent=19 // pred_region
          %s56 = sand.u32 1, 7
          %s57 = ssub.s32 1, %s56
          %s58 = scalar_lea.vmem %s29, %s57
          %s59 = ssub.s32 1, %s56
          %s60 = scalar_lea.vmem %s30, %s59 [#allocation2]
          %s61 = sshll.u32 1, %s56
          %s62 = ssub.s32 %s61, 1
          loop: start=0, step=1, limit=1
          $region36: #{word_embedding_forward.1} parent=34 // loop_pre_header
            _
          $region37: #{word_embedding_forward.1} parent=34 // loop_header
            %s64 = sphi 0, %s68
            %p65 = scmp.ge.s32.totalorder %s64, 1
            %s69 = sphi %s58, %s58
            %s70 = sphi %s60, %s60
          $region38: #{word_embedding_forward.1} parent=34 // loop_header_branch
            %67 = sbr.rel (%p65) target = $region42
          $region39: #{word_embedding_forward.1} parent=34 // loop_body
            %v71 = vld [vmem:[%s69] sm:%s62]
            %72 = vst [vmem:[%s70] sm:%s62] %v71
          $region40: #{word_embedding_forward.1} parent=34 // loop_footer
            %s68 = sadd.s32 1, %s64
          $region41: #{word_embedding_forward.1} parent=34 // loop_footer_branch
            %63 = sbr.rel target = $region37
          $region42: #{word_embedding_forward.1} parent=34 // loop_exit
            _
        $region35: #{word_embedding_forward.1} parent=19 // pred_fallthru
          _
      $region20: #{word_embedding_forward.1} parent=13 // pred_fallthru
        _
      // Predicated region
      $region21: #{word_embedding_forward.1} parent=13 // pred_check
        %p36 = pneg %p32
      $region22: #{word_embedding_forward.1} parent=13 // pred_check_branch
        %38 = sbr.rel (%p36) target = $region24
      $region23: #{word_embedding_forward.1} parent=13 // pred_region
        %s39 = sshll.u32 1, 1
        %s40 = ssub.s32 %s39, 1
        loop: start=0, step=1, limit=1
        $region25: #{word_embedding_forward.1} parent=23 // loop_pre_header
          _
        $region26: #{word_embedding_forward.1} parent=23 // loop_header
          %s42 = sphi 0, %s46
          %p43 = scmp.ge.s32.totalorder %s42, 1
          %s47 = sphi %s29, %s29
          %s48 = sphi %s30, %s30
        $region27: #{word_embedding_forward.1} parent=23 // loop_header_branch
          %45 = sbr.rel (%p43) target = $region31
        $region28: #{word_embedding_forward.1} parent=23 // loop_body
          %v49 = vld [vmem:[%s47] sm:%s40]
          %50 = vst [vmem:[%s48] sm:%s40] %v49
        $region29: #{word_embedding_forward.1} parent=23 // loop_footer
          %s46 = sadd.s32 1, %s42
        $region30: #{word_embedding_forward.1} parent=23 // loop_footer_branch
          %41 = sbr.rel target = $region26
        $region31: #{word_embedding_forward.1} parent=23 // loop_exit
          _
      $region24: #{word_embedding_forward.1} parent=13 // pred_fallthru
        _
      // Predicated region
      $region43: #{word_embedding_forward.1} parent=13 // pred_check
        _
      $region44: #{word_embedding_forward.1} parent=13 // pred_check_branch
        %75 = sbr.rel (0) target = $region46
      $region45: #{word_embedding_forward.1} parent=13 // pred_region
        %76 = vsyncadd [#allocation3], 16
      $region46: #{word_embedding_forward.1} parent=13 // pred_fallthru
        _
    $region14: #{word_embedding_forward.1} parent=1 // loop_footer
      %s26 = sadd.s32 1, %s22
    $region15: #{word_embedding_forward.1} parent=1 // loop_footer_branch
      %21 = sbr.rel target = $region11
    $region16: #{word_embedding_forward.1} parent=1 // loop_exit
      _
    loop: start=0, step=1, limit=16
    $region47: #{word_embedding_forward.1} parent=1 // loop_pre_header
      _
    $region48: #{word_embedding_forward.1} parent=1 // loop_header
      %s78 = sphi 0, %s82
      %p79 = scmp.ge.s32.totalorder %s78, 16
    $region49: #{word_embedding_forward.1} parent=1 // loop_header_branch
      %81 = sbr.rel (%p79) target = $region53
    $region50: #{word_embedding_forward.1} parent=1 // loop_body
      %84 = dma.done [#allocation3], 16
    $region51: #{word_embedding_forward.1} parent=1 // loop_footer
      %s82 = sadd.s32 1, %s78
    $region52: #{word_embedding_forward.1} parent=1 // loop_footer_branch
      %77 = sbr.rel target = $region48
    $region53: #{word_embedding_forward.1} parent=1 // loop_exit
      _
    %v85 = vld [vmem:[#allocation2] sm:$0xff]
    %v86 = vld [vmem:[#allocation2 + $0x8] sm:$0xff]
    %vm87 = vcmask 261120
    %v88 = vsel %vm87, %v85, 0.0
    %89 = vadd.xlane.f32.xlu0 %v88
    %v90 = vpop.xlane.xlu0 %89
    %v91 = vsel %vm87, %v86, 0.0
    %92 = vadd.xlane.f32.xlu0 %v91
    %v93 = vpop.xlane.xlu0 %92
    %v94 = vrcp.pop 32.0
    %v95 = vmul.f32 %v90, %v94
    %v96 = vmul.f32 %v93, %v94
    %v97 = vsub.f32 %v85, %v95
    %v98 = vsub.f32 %v86, %v96
    %v99 = vmul.f32 %v97, %v97
    %v100 = vmul.f32 %v98, %v98
    %v101 = vsel %vm87, %v99, 0.0
    %102 = vadd.xlane.f32.xlu0 %v101
    %v103 = vpop.xlane.xlu0 %102
    %v104 = vsel %vm87, %v100, 0.0
    %105 = vadd.xlane.f32.xlu0 %v104
    %v106 = vpop.xlane.xlu0 %105
    %v107 = vrcp.pop 31.0
    %v108 = vmul.f32 %v103, %v107
    %v109 = vmul.f32 %v106, %v107
    %v110 = vrsqrt.pop %v108
    %v111 = vmul.f32 %v108, %v110
    %vm112 = vcmp.eq.f32.partialorder %v108, inf
    %v113 = vsel %vm112, %v108, %v111
    %vm114 = vcmp.eq.f32.partialorder %v108, 0.0
    %v115 = vand.u32 %v108, 2147483648
    %v116 = vsel %vm114, %v115, %v113
    %v117 = vrsqrt.pop %v109
    %v118 = vmul.f32 %v109, %v117
    %vm119 = vcmp.eq.f32.partialorder %v109, inf
    %v120 = vsel %vm119, %v109, %v118
    %vm121 = vcmp.eq.f32.partialorder %v109, 0.0
    %v122 = vand.u32 %v109, 2147483648
    %v123 = vsel %vm121, %v122, %v120
    %v124 = vadd.f32 %v116, 1e-06
    %v125 = vadd.f32 %v123, 1e-06
    %v126 = vrcp.pop %v124
    %v127 = vrcp.pop %v125
    %v128 = vld [vmem:[%s2] sm:$0x1]
    %v130 = vlaneseq
    %v131 = vshrl.u32 %v130, 7
    %v132 = vsub.s32 0, %v131
    %v133 = vrot.slane %v128, %v132
    %v135 = vmul.f32 %v133, %v126
    %v136 = vmul.f32 %v133, %v127
    %v137 = vmul.f32 %v135, %v97
    %v138 = vmul.f32 %v136, %v98
    %v139 = vld [vmem:[%s3] sm:$0x1]
    %v141 = vlaneseq
    %v142 = vshrl.u32 %v141, 7
    %v143 = vsub.s32 0, %v142
    %v144 = vrot.slane %v139, %v143
    %v146 = vadd.f32 %v137, %v144
    %v147 = vadd.f32 %v138, %v144
    %148 = vst.msk [vmem:[#allocation6] sm:$0xff] %vm87, %v146
    %149 = vst.msk [vmem:[#allocation6 + $0x8] sm:$0xff] %vm87, %v147
    // Predicated region
    $region54: #{word_embedding_forward.1} parent=1 // pred_check
      _
    $region55: #{word_embedding_forward.1} parent=1 // pred_check_branch
      %151 = sbr.rel (0) target = $region57
    $region56: #{word_embedding_forward.1} parent=1 // pred_region
      %s153 = ssub.s32 256, 256
      %154 = vsyncadd [#allocation7], %s153
      %s155 = sshll.u32 [#allocation6], 4
      %s156 = int_to_ptr.vmem [resolvable:$true] %s155
      %161 = dma.vmem_to_hbm [thread:$0]  %s156, 256, %s4, [#allocation7], 128, 128, 8
    $region57: #{word_embedding_forward.1} parent=1 // pred_fallthru
      _
    // Predicated region
    $region58: #{word_embedding_forward.1} parent=1 // pred_check
      _
    $region59: #{word_embedding_forward.1} parent=1 // pred_check_branch
      %163 = sbr.rel (0) target = $region61
    $region60: #{word_embedding_forward.1} parent=1 // pred_region
      %164 = dma.done [#allocation7], 256
    $region61: #{word_embedding_forward.1} parent=1 // pred_fallthru
      _
    %165 = vsyncpa [#allocation7], 1
  %166 = vsyncmov [#allocation3]
  %s167 = vpop.sfrf %166
  %p168 = scmp.eq.s32.totalorder %s167, 0
  %p169 = pneg %p168
  %171 = shalt.err (%p169)

</llo_original>
